<compile_context>
chip_gen: v7x
topology: tpu7x:2x2x1
jax: 0.10.0
libtpu: 0.0.40
codegen_flags: <defaults>
</compile_context>

<pallas_src>
import jax
import jax.numpy as jnp
from jax.experimental import pallas as pl
from jax.experimental.pallas import tpu as pltpu


_NEG_BIG = -1e30  # bias for padded vocab columns -> exp() underflows to exactly 0


def _round_up(x, m):
    return (x + m - 1) // m * m


def _pick_tn(vocab_pad, tn_req):
    """Largest 128-aligned chunk <= tn_req that exactly tiles vocab_pad.

    Prefers 256-aligned chunks (v6e/v7x MXU is 256 wide); 128 always works.
    """
    tn_req = max(128, (int(tn_req) // 128) * 128)
    hi = min(tn_req, vocab_pad)
    for step in (256, 128):
        start = hi - (hi % step)
        for cand in range(start, step - 1, -step):
            if cand > 0 and vocab_pad % cand == 0:
                return cand
    return 128


def _generator_kernel(x_ref, w_ref, b_ref, o_ref, logits_ref, m_ref, l_ref):
    # x_ref      : (tm, d_model)       input rows, resident across the vocab axis
    # w_ref      : (d_model, tn)       streamed weight chunk (double-buffered)
    # b_ref      : (1, tn)             f32 bias chunk (-1e30 on padded columns)
    # o_ref      : (tm, vocab_pad)     output block, written only at the last chunk
    # logits_ref : (nj, tm, tn) f32    raw-logits stash (scratch)
    # m_ref      : (tm, 1) f32         running row max (scratch)
    # l_ref      : (tm, 1) f32         running row sum of exp(logit - max) (scratch)
    j = pl.program_id(1)
    nj = pl.num_programs(1)

    @pl.when(j == 0)
    def _init():
        m_ref[...] = jnp.full(m_ref.shape, -jnp.inf, dtype=m_ref.dtype)
        l_ref[...] = jnp.zeros(l_ref.shape, dtype=l_ref.dtype)

    # One vocab chunk of logits (f32 accumulation on the MXU).
    logits = jnp.dot(x_ref[...], w_ref[...], preferred_element_type=jnp.float32)
    logits = logits + b_ref[...]          # implicit VPU broadcast of the bias row

    # Online (flash-style) max / sum-of-exp update over the vocab axis.
    m_prev = m_ref[...]
    m_new = jnp.maximum(m_prev, jnp.max(logits, axis=-1, keepdims=True))
    l_ref[...] = (jnp.exp(m_prev - m_new) * l_ref[...]
                  + jnp.sum(jnp.exp(logits - m_new), axis=-1, keepdims=True))
    m_ref[...] = m_new

    # Stash raw f32 logits for this chunk (dynamic index on the leading dim only).
    logits_ref[j] = logits

    @pl.when(j == nj - 1)
    def _finalize():
        lse = m_ref[...] + jnp.log(l_ref[...])
        nj_static = logits_ref.shape[0]
        tn = logits_ref.shape[2]
        # Static unroll: every store is a lane-dense, 128-aligned slab.
        for jj in range(nj_static):
            o_ref[:, jj * tn:(jj + 1) * tn] = (logits_ref[jj] - lse).astype(o_ref.dtype)


def generator_log_softmax(x, w, b, *, tm=256, tn=2048,
                          out_dtype=jnp.float32, matmul_dtype=None):
    """log_softmax(x @ w + b, axis=-1) as a Pallas TPU kernel.

    x: [B, S, d_model]; w: [d_model, vocab] (transposed from PyTorch's
    [vocab, d_model]); b: [vocab].  Returns [B, S, vocab] in `out_dtype`
    (f32 by default, matching F.log_softmax precision for f32 inputs).
    `matmul_dtype=jnp.bfloat16` casts the matmul operands for full-rate MXU
    throughput (accumulation / softmax math remain f32).
    """
    B, S, d_model = x.shape
    vocab = w.shape[1]
    M = B * S

    x2d = x.reshape(M, d_model)
    if matmul_dtype is not None:
        x2d = x2d.astype(matmul_dtype)
        w = w.astype(matmul_dtype)

    xsize = jnp.dtype(x2d.dtype).itemsize
    wsize = jnp.dtype(w.dtype).itemsize
    osize = jnp.dtype(out_dtype).itemsize

    # Lane-dense vocab; chunk size tn exactly tiles the padded vocab.
    vocab_pad = _round_up(vocab, 128)
    tn = _pick_tn(vocab_pad, tn)
    nj = vocab_pad // tn

    # Row tile: multiple of the dtype's sublane packing; no wrapper-side row
    # padding -- the row grid uses cdiv and Pallas masks the ragged last block.
    sub = max(8, 32 // xsize)                      # 8 for f32, 16 for bf16, 32 for int8/fp8
    tm = _round_up(max(sub, min(int(tm), _round_up(M, sub))), sub)

    # VMEM budget derived from the actual device (v7x: 64 MiB per TC).
    try:
        vmem_cap = int(pltpu.get_tpu_info().vmem_capacity_bytes)
    except Exception:
        vmem_cap = 64 << 20                        # conservative fallback

    def _working_set(tm_):
        return (2 * tm_ * d_model * xsize          # x tile (double-buffered)
                + 2 * d_model * tn * wsize         # streamed W chunk (double-buffered)
                + 2 * tn * 4                       # bias chunk
                + 2 * tm_ * vocab_pad * osize      # resident output block (double-buffered)
                + tm_ * vocab_pad * 4              # f32 logits stash
                + 4 * tm_ * 4                      # running max / sum scratch
                + 3 * tm_ * tn * 4)                # f32 per-chunk temporaries

    while tm > sub and _working_set(tm) > vmem_cap - (8 << 20):
        tm = max(sub, _round_up(tm // 2, sub))
    # TODO(synk): if even tm == sub does not fit (enormous vocab * d_model), a
    # two-pass vocab-tiled formulation (per-chunk logits output + lse fix-up)
    # and/or tn shrinking would be needed.

    vmem_limit = int(max(16 << 20, min(_working_set(tm) + (4 << 20),
                                       vmem_cap - (1 << 20))))

    # Pad weight / bias columns only when the vocab is not already lane-aligned.
    if vocab_pad != vocab:
        w = jnp.pad(w, ((0, 0), (0, vocab_pad - vocab)))   # zero pad (invariant!)
        b_pad = jnp.full((vocab_pad,), _NEG_BIG, dtype=jnp.float32)
        b_pad = b_pad.at[:vocab].set(b.astype(jnp.float32))
    else:
        b_pad = b.astype(jnp.float32)
    b2d = b_pad.reshape(1, vocab_pad)

    grid_m = pl.cdiv(M, tm)

    cost = pl.CostEstimate(
        flops=2 * M * d_model * vocab_pad,
        transcendentals=M * vocab_pad,
        bytes_accessed=(M * d_model * xsize
                        + grid_m * d_model * vocab_pad * wsize   # W re-streamed per row tile
                        + vocab_pad * 4
                        + M * vocab_pad * osize))

    out2d = pl.pallas_call(
        _generator_kernel,
        out_shape=jax.ShapeDtypeStruct((M, vocab_pad), out_dtype),
        grid_spec=pltpu.PrefetchScalarGridSpec(
            num_scalar_prefetch=0,
            grid=(grid_m, nj),                                   # vocab axis last
            in_specs=[
                pl.BlockSpec((tm, d_model), lambda i, j: (i, 0)),  # x rows (resident over j)
                pl.BlockSpec((d_model, tn), lambda i, j: (0, j)),  # streamed W chunk
                pl.BlockSpec((1, tn), lambda i, j: (0, j)),        # bias chunk
            ],
            out_specs=pl.BlockSpec((tm, vocab_pad), lambda i, j: (i, 0)),
            scratch_shapes=[
                pltpu.VMEM((nj, tm, tn), jnp.float32),   # raw logits stash
                pltpu.VMEM((tm, 1), jnp.float32),        # running max
                pltpu.VMEM((tm, 1), jnp.float32),        # running sum of exp
            ],
        ),
        compiler_params=pltpu.CompilerParams(
            dimension_semantics=("parallel", "arbitrary"),
            vmem_limit_bytes=vmem_limit),
        cost_estimate=cost,
    )(x2d, w, b2d)

    # TODO(synk): for decode-sized M on v7x, additionally splitting the vocab
    # axis across the two TensorCores (per-chunk lse outputs + cheap fix-up)
    # would keep both MXUs busy.
    if vocab_pad != vocab:
        out2d = out2d[:, :vocab]
    return out2d.reshape(B, S, vocab)


def _reference(x, w, b):
    logits = jnp.einsum("bsd,dv->bsv",
                        x.astype(jnp.float32), w.astype(jnp.float32)) + b.astype(jnp.float32)
    return jax.nn.log_softmax(logits, axis=-1)


if __name__ == "__main__":
    # Small shapes consistent with the module: batch=2, seq=8, d_model=32, vocab=128.
    B, S, d_model, vocab = 2, 8, 32, 128

    key = jax.random.PRNGKey(0)
    kx, kw, kb = jax.random.split(key, 3)

    x = jax.random.normal(kx, (B, S, d_model), dtype=jnp.float32)

    # Deterministic params mimicking nn.Linear's default uniform init bound.
    bound = 1.0 / (d_model ** 0.5)
    w = jax.random.uniform(kw, (d_model, vocab), jnp.float32, -bound, bound)  # [in, out]
    b = jax.random.uniform(kb, (vocab,), jnp.float32, -bound, bound)

    out = jax.block_until_ready(generator_log_softmax(x, w, b))
    ref = _reference(x, w, b)
    assert out.shape == (B, S, vocab)
    assert jnp.allclose(out, ref, atol=1e-5, rtol=1e-5), "mismatch vs reference"

    # Second tiny check exercising the online-softmax path: multiple vocab
    # chunks, padded vocab columns, and a ragged last row tile.
    B2, S2, d2, v2 = 2, 9, 32, 300
    ka, kc, kd = jax.random.split(jax.random.PRNGKey(1), 3)
    x2 = jax.random.normal(ka, (B2, S2, d2), dtype=jnp.float32)
    w2 = jax.random.uniform(kc, (d2, v2), jnp.float32, -bound, bound)
    b2 = jax.random.uniform(kd, (v2,), jnp.float32, -bound, bound)
    out2 = jax.block_until_ready(generator_log_softmax(x2, w2, b2, tm=8, tn=128))
    ref2 = _reference(x2, w2, b2)
    assert out2.shape == (B2, S2, v2)
    assert jnp.allclose(out2, ref2, atol=1e-5, rtol=1e-5), "mismatch vs reference (chunked)"

    print("KERNEL_OK")
</pallas_src>

<mosaic_0001>
module attributes {stable_mosaic.version = 11 : i64} {
  func.func @_generator_kernel(%arg0: i32, %arg1: i32, %arg2: memref<16x32xf32, #tpu.memory_space<vmem>>, %arg3: memref<32x128xf32, #tpu.memory_space<vmem>>, %arg4: memref<1x128xf32, #tpu.memory_space<vmem>>, %arg5: memref<16x128xf32, #tpu.memory_space<vmem>>, %arg6: memref<1x16x128xf32, #tpu.memory_space<vmem>>, %arg7: memref<16x1xf32, #tpu.memory_space<vmem>>, %arg8: memref<16x1xf32, #tpu.memory_space<vmem>>) attributes {dimension_semantics = [#tpu.dimension_semantics<parallel>, #tpu.dimension_semantics<arbitrary>], iteration_bounds = array<i64: 1, 1>, scalar_prefetch = 0 : i64, scratch_operands = 3 : i64, tpu.core_type = #tpu.core_type<tc>, window_params = [{transform_indices = @transform_0, window_bounds = array<i64: 16, 32>}, {transform_indices = @transform_1, window_bounds = array<i64: 32, 128>}, {transform_indices = @transform_2, window_bounds = array<i64: 1, 128>}, {transform_indices = @transform_3, window_bounds = array<i64: 16, 128>}]} {
    %c0_i32 = arith.constant 0 : i32
    %0 = arith.cmpi eq, %arg1, %c0_i32 : i32
    %1 = arith.extui %0 : i1 to i32
    %c0_i32_0 = arith.constant 0 : i32
    %2 = arith.cmpi ne, %1, %c0_i32_0 : i32
    scf.if %2 {
      %cst_20 = arith.constant 0xFF800000 : f32
      %32 = vector.broadcast %cst_20 : f32 to vector<16x1xf32>
      %c0_21 = arith.constant 0 : index
      %c0_22 = arith.constant 0 : index
      %33 = vector.load %arg7[%c0_21, %c0_22] : memref<16x1xf32, #tpu.memory_space<vmem>>, vector<16x1xf32>
      tpu.vector_store %arg7[%c0_21, %c0_22], %32 {strides = array<i32>} : memref<16x1xf32, #tpu.memory_space<vmem>>, vector<16x1xf32>,
      %cst_23 = arith.constant 0.000000e+00 : f32
      %34 = vector.broadcast %cst_23 : f32 to vector<16x1xf32>
      %c0_24 = arith.constant 0 : index
      %c0_25 = arith.constant 0 : index
      %35 = vector.load %arg8[%c0_24, %c0_25] : memref<16x1xf32, #tpu.memory_space<vmem>>, vector<16x1xf32>
      tpu.vector_store %arg8[%c0_24, %c0_25], %34 {strides = array<i32>} : memref<16x1xf32, #tpu.memory_space<vmem>>, vector<16x1xf32>,
    } else {
    }
    %c0 = arith.constant 0 : index
    %c0_1 = arith.constant 0 : index
    %3 = vector.load %arg2[%c0, %c0_1] : memref<16x32xf32, #tpu.memory_space<vmem>>, vector<16x32xf32>
    %c0_2 = arith.constant 0 : index
    %c0_3 = arith.constant 0 : index
    %4 = vector.load %arg3[%c0_2, %c0_3] : memref<32x128xf32, #tpu.memory_space<vmem>>, vector<32x128xf32>
    %cst = arith.constant dense<0.000000e+00> : vector<16x128xf32>
    %5 = tpu.matmul %3, %4, %cst {dimension_numbers = #tpu.dot_dimension_numbers<[1], [0], [0], [1], [0, 0, 1, 1], [], []>} : vector<16x32xf32>, vector<32x128xf32>, vector<16x128xf32> -> vector<16x128xf32>
    %c0_4 = arith.constant 0 : index
    %c0_5 = arith.constant 0 : index
    %6 = vector.load %arg4[%c0_4, %c0_5] : memref<1x128xf32, #tpu.memory_space<vmem>>, vector<1x128xf32>
    %7 = vector.broadcast %6 : vector<1x128xf32> to vector<16x128xf32>
    %8 = arith.addf %5, %7 : vector<16x128xf32>
    %c0_6 = arith.constant 0 : index
    %c0_7 = arith.constant 0 : index
    %9 = vector.load %arg7[%c0_6, %c0_7] : memref<16x1xf32, #tpu.memory_space<vmem>>, vector<16x1xf32>
    %cst_8 = arith.constant dense<0xFF800000> : vector<16xf32>
    %10 = vector.multi_reduction <maximumf>, %8, %cst_8 [1] : vector<16x128xf32> to vector<16xf32>
    %11 = vector.shape_cast %10 : vector<16xf32> to vector<16x1xf32>
    %12 = arith.maximumf %9, %11 : vector<16x1xf32>
    %13 = arith.subf %9, %12 : vector<16x1xf32>
    %14 = math.exp %13 : vector<16x1xf32>
    %c0_9 = arith.constant 0 : index
    %c0_10 = arith.constant 0 : index
    %15 = vector.load %arg8[%c0_9, %c0_10] : memref<16x1xf32, #tpu.memory_space<vmem>>, vector<16x1xf32>
    %16 = arith.mulf %14, %15 : vector<16x1xf32>
    %17 = vector.broadcast %12 : vector<16x1xf32> to vector<16x128xf32>
    %18 = arith.subf %8, %17 : vector<16x128xf32>
    %19 = math.exp %18 : vector<16x128xf32>
    %cst_11 = arith.constant dense<0.000000e+00> : vector<16xf32>
    %20 = vector.multi_reduction <add>, %19, %cst_11 [1] : vector<16x128xf32> to vector<16xf32>
    %21 = vector.shape_cast %20 : vector<16xf32> to vector<16x1xf32>
    %22 = arith.addf %16, %21 : vector<16x1xf32>
    %c0_12 = arith.constant 0 : index
    %c0_13 = arith.constant 0 : index
    %23 = vector.load %arg8[%c0_12, %c0_13] : memref<16x1xf32, #tpu.memory_space<vmem>>, vector<16x1xf32>
    tpu.vector_store %arg8[%c0_12, %c0_13], %22 {strides = array<i32>} : memref<16x1xf32, #tpu.memory_space<vmem>>, vector<16x1xf32>,
    %c0_14 = arith.constant 0 : index
    %c0_15 = arith.constant 0 : index
    %24 = vector.load %arg7[%c0_14, %c0_15] : memref<16x1xf32, #tpu.memory_space<vmem>>, vector<16x1xf32>
    tpu.vector_store %arg7[%c0_14, %c0_15], %12 {strides = array<i32>} : memref<16x1xf32, #tpu.memory_space<vmem>>, vector<16x1xf32>,
    %25 = arith.index_cast %arg1 : i32 to index
    %c0_16 = arith.constant 0 : index
    %c0_17 = arith.constant 0 : index
    %26 = vector.load %arg6[%25, %c0_16, %c0_17] : memref<1x16x128xf32, #tpu.memory_space<vmem>>, vector<1x16x128xf32>
    %27 = vector.shape_cast %26 : vector<1x16x128xf32> to vector<16x128xf32>
    %28 = vector.shape_cast %8 : vector<16x128xf32> to vector<1x16x128xf32>
    tpu.vector_store %arg6[%25, %c0_16, %c0_17], %28 {strides = array<i32>} : memref<1x16x128xf32, #tpu.memory_space<vmem>>, vector<1x16x128xf32>,
    %c0_i32_18 = arith.constant 0 : i32
    %29 = arith.cmpi eq, %arg1, %c0_i32_18 : i32
    %30 = arith.extui %29 : i1 to i32
    %c0_i32_19 = arith.constant 0 : i32
    %31 = arith.cmpi ne, %30, %c0_i32_19 : i32
    scf.if %31 {
      %c0_20 = arith.constant 0 : index
      %c0_21 = arith.constant 0 : index
      %32 = vector.load %arg7[%c0_20, %c0_21] : memref<16x1xf32, #tpu.memory_space<vmem>>, vector<16x1xf32>
      %c0_22 = arith.constant 0 : index
      %c0_23 = arith.constant 0 : index
      %33 = vector.load %arg8[%c0_22, %c0_23] : memref<16x1xf32, #tpu.memory_space<vmem>>, vector<16x1xf32>
      %34 = math.log %33 : vector<16x1xf32>
      %35 = arith.addf %32, %34 : vector<16x1xf32>
      %c0_24 = arith.constant 0 : index
      %c0_25 = arith.constant 0 : index
      %c0_26 = arith.constant 0 : index
      %36 = vector.load %arg6[%c0_24, %c0_25, %c0_26] : memref<1x16x128xf32, #tpu.memory_space<vmem>>, vector<1x16x128xf32>
      %37 = vector.shape_cast %36 : vector<1x16x128xf32> to vector<16x128xf32>
      %38 = vector.broadcast %35 : vector<16x1xf32> to vector<16x128xf32>
      %39 = arith.subf %37, %38 : vector<16x128xf32>
      %c0_27 = arith.constant 0 : index
      %c0_28 = arith.constant 0 : index
      %40 = vector.load %arg5[%c0_27, %c0_28] : memref<16x128xf32, #tpu.memory_space<vmem>>, vector<16x128xf32>
      tpu.vector_store %arg5[%c0_27, %c0_28], %39 {strides = array<i32>} : memref<16x128xf32, #tpu.memory_space<vmem>>, vector<16x128xf32>,
    } else {
    }
    return
  }
  func.func @transform_0(%arg0: i32, %arg1: i32) -> (i32, i32) {
    %c0_i32 = arith.constant 0 : i32
    %c0_i32_0 = arith.constant 0 : i32
    return %arg0, %c0_i32 : i32, i32
  }
  func.func @transform_1(%arg0: i32, %arg1: i32) -> (i32, i32) {
    %c0_i32 = arith.constant 0 : i32
    %c0_i32_0 = arith.constant 0 : i32
    return %c0_i32, %arg1 : i32, i32
  }
  func.func @transform_2(%arg0: i32, %arg1: i32) -> (i32, i32) {
    %c0_i32 = arith.constant 0 : i32
    %c0_i32_0 = arith.constant 0 : i32
    return %c0_i32, %arg1 : i32, i32
  }
  func.func @transform_3(%arg0: i32, %arg1: i32) -> (i32, i32) {
    %c0_i32 = arith.constant 0 : i32
    %c0_i32_0 = arith.constant 0 : i32
    return %arg0, %c0_i32 : i32, i32
  }
}

</mosaic_0001>

<llo_original>
// kernel: tpu_custom_call.1
$region0: #{tpu_custom_call.1}
  #allocation0 [shape = 'u32[]', space=smem, size = 0x4, offset = 0x4, fixed_abs, tag = 'smem constant byte address 0x4 - core index']
  #allocation1 [shape = 'u32[144,128]{1,0:T(1,128)}', space=vmem, size = 0x12000, scoped, tag = 'internal scratch']
  #allocation2 [shape = 'f32[1,16,128]{2,1,0:T(8,128)}', space=vmem, size = 0x2000, scoped, tag = 'scratch operand']
  #allocation3 [shape = 'f32[16,1]{1,0:T(8,128)}', space=vmem, size = 0x2000, scoped, tag = 'scratch operand']
  #allocation4 [shape = 'f32[16,1]{1,0:T(8,128)}', space=vmem, size = 0x2000, scoped, tag = 'scratch operand']
  %s0 = inlined_call_operand.hbm [shape: f32[16,32], index: 0, kind: input, shape index: {}]
  %s1 = inlined_call_operand.hbm [shape: f32[32,128], index: 1, kind: input, shape index: {}]
  %s2 = inlined_call_operand.vmem [shape: f32[1,128], index: 2, kind: input, shape index: {}]
  %s3 = inlined_call_operand.hbm [shape: f32[16,128], index: 3, kind: output, shape index: {}]
  %s4 = sld [smem:[#allocation0]]
  $region38: #{tpu_custom_call.1} parent=0
    _
  %s6 = ssub.s32 1, %s4
  %s7 = scalar_select 0, %s6, %s4
  $region1: #{tpu_custom_call.1} parent=0
    #allocation5 [shape = 'u8[8192]{0}', space=vmem, size = 0x2000, scoped, tag = 'input window, operand 0, single buffered']
    #allocation6 [shape = 's32[1]{0}', space=sflag, size = 0x4, scoped, tag = 'scoped memory for tpu_custom_call.1']
    #allocation7 [shape = 's32[1]{0}', space=sflag, size = 0x4, scoped, tag = 'scoped memory for tpu_custom_call.1']
    #allocation8 [shape = 'u8[16384]{0}', space=vmem, size = 0x4000, scoped, tag = 'input window, operand 1, single buffered']
    #allocation9 [shape = 's32[1]{0}', space=sflag, size = 0x4, scoped, tag = 'scoped memory for tpu_custom_call.1']
    #allocation10 [shape = 'u8[8192]{0}', space=vmem, size = 0x2000, scoped, tag = 'output window, operand 0, single buffered']
    %8 = vsyncpa [#allocation6], 0
    %9 = vsyncpa [#allocation9], 0
    %10 = vsyncpa [#allocation7], 0
    // Predicated region
    $region2: #{tpu_custom_call.1} parent=1 // pred_check
      _
    $region3: #{tpu_custom_call.1} parent=1 // pred_check_branch
      %12 = sbr.rel (0) target = $region5
    $region4: #{tpu_custom_call.1} parent=1 // pred_region
      %s14 = ssub.s32 256, 256
      %15 = vsyncadd [#allocation6], %s14
      %s16 = sshll.u32 [#allocation5], 4
      %s17 = int_to_ptr.vmem [resolvable:$true] %s16
      %22 = dma.hbm_to_vmem [thread:$0]  %s0, 256, %s17, [#allocation6], 128, 128, 8
    $region5: #{tpu_custom_call.1} parent=1 // pred_fallthru
      _
    // Predicated region
    $region6: #{tpu_custom_call.1} parent=1 // pred_check
      _
    $region7: #{tpu_custom_call.1} parent=1 // pred_check_branch
      %24 = sbr.rel (0) target = $region9
    $region8: #{tpu_custom_call.1} parent=1 // pred_region
      %s26 = ssub.s32 512, 512
      %27 = vsyncadd [#allocation9], %s26
      %s28 = sshll.u32 [#allocation8], 4
      %s29 = int_to_ptr.vmem [resolvable:$true] %s28
      %34 = dma.hbm_to_vmem [thread:$0]  %s1, 512, %s29, [#allocation9], 128, 128, 8
    $region9: #{tpu_custom_call.1} parent=1 // pred_fallthru
      _
    // Predicated region
    $region10: #{tpu_custom_call.1} parent=1 // pred_check
      _
    $region11: #{tpu_custom_call.1} parent=1 // pred_check_branch
      %36 = sbr.rel (0) target = $region13
    $region12: #{tpu_custom_call.1} parent=1 // pred_region
      _
    $region13: #{tpu_custom_call.1} parent=1 // pred_fallthru
      _
    // Predicated region
    $region14: #{tpu_custom_call.1} parent=1 // pred_check
      _
    $region15: #{tpu_custom_call.1} parent=1 // pred_check_branch
      %38 = sbr.rel (0) target = $region17
    $region16: #{tpu_custom_call.1} parent=1 // pred_region
      %39 = dma.done [#allocation6], 256
    $region17: #{tpu_custom_call.1} parent=1 // pred_fallthru
      _
    // Predicated region
    $region18: #{tpu_custom_call.1} parent=1 // pred_check
      _
    $region19: #{tpu_custom_call.1} parent=1 // pred_check_branch
      %41 = sbr.rel (0) target = $region21
    $region20: #{tpu_custom_call.1} parent=1 // pred_region
      %42 = dma.done [#allocation9], 512
    $region21: #{tpu_custom_call.1} parent=1 // pred_fallthru
      _
    %p43 = scmp.eq.s32.totalorder 0, 0
    // Predicated region
    $region22: #{tpu_custom_call.1} parent=1 // pred_check
      %p44 = pneg %p43
    $region23: #{tpu_custom_call.1} parent=1 // pred_check_branch
      %46 = sbr.rel (%p44) target = $region25
    $region24: #{tpu_custom_call.1} parent=1 // pred_region
      %vm47 = vcmask 7168
      %48 = vst.msk [vmem:[#allocation3] sm:$0xff] %vm47, -inf
      %49 = vst.msk [vmem:[#allocation3 + $0x8] sm:$0xff] %vm47, -inf
      %50 = vst.msk [vmem:[#allocation4] sm:$0xff] %vm47, 0.0
      %51 = vst.msk [vmem:[#allocation4 + $0x8] sm:$0xff] %vm47, 0.0
    $region25: #{tpu_custom_call.1} parent=1 // pred_fallthru
      _
    %v52 = vld [vmem:[#allocation5] sm:$0xff]
    %v53 = vld [vmem:[#allocation5 + $0x8] sm:$0xff]
    %v54 = vld [vmem:[#allocation8] sm:$0xff]
    %v55 = vld [vmem:[#allocation8 + $0x8] sm:$0xff]
    %v56 = vld [vmem:[#allocation8 + $0x10] sm:$0xff]
    %v57 = vld [vmem:[#allocation8 + $0x18] sm:$0xff]
    %v58 = vld [vmem:[%s2] sm:$0x1]
    %v60 = vlaneseq
    %v61 = vshrl.u32 %v60, 7
    %v62 = vsub.s32 0, %v61
    %v63 = vrot.slane %v58, %v62
    %vm65 = vcmask 261120
    %v67 = vsel %vm65, %v52, 0
    %v70 = vsel %vm65, %v53, 0
    %72 = vmatprep.subr.mxu0 0.0
    %73 = vmatpush1.msra.mxu0 %v54
    %74 = vmatprep.subr.mxu0 0.0
    %75 = vmatpush1.msra.mxu0 %v55
    %76 = vmatprep.subr.mxu0 0.0
    %77 = vmatpush1.msra.mxu0 %v56
    %78 = vmatprep.subr.mxu0 0.0
    %79 = vmatpush1.msra.mxu0 %v57
    %80 = vmatprep.subr.mxu0 0.0
    %81 = vmatpush1.msra.mxu0 0.0
    %82 = vmatprep.subr.mxu0 0.0
    %83 = vmatpush1.msra.mxu0 0.0
    %84 = vmatprep.subr.mxu0 0.0
    %85 = vmatpush1.msra.mxu0 0.0
    %86 = vmatprep.subr.mxu0 0.0
    %87 = vmatpush1.msra.mxu0 0.0
    %88 = vmatprep.subr.mxu0 0.0
    %89 = vmatpush1.msra.mxu0 0.0
    %90 = vmatprep.subr.mxu0 0.0
    %91 = vmatpush1.msra.mxu0 0.0
    %92 = vmatprep.subr.mxu0 0.0
    %93 = vmatpush1.msra.mxu0 0.0
    %94 = vmatprep.subr.mxu0 0.0
    %95 = vmatpush1.msra.mxu0 0.0
    %96 = vmatprep.subr.mxu0 0.0
    %97 = vmatpush1.msra.mxu0 0.0
    %98 = vmatprep.subr.mxu0 0.0
    %99 = vmatpush1.msra.mxu0 0.0
    %100 = vmatprep.subr.mxu0 0.0
    %101 = vmatpush1.msra.mxu0 0.0
    %102 = vmatprep.subr.mxu0 0.0
    %103 = vmatpush1.msra.mxu0 0.0
    %104 = vmatprep.subr.mxu0 0.0
    %105 = vmatpush1.msra.mxu0 0.0
    %106 = vmatprep.subr.mxu0 0.0
    %107 = vmatpush1.msra.mxu0 0.0
    %108 = vmatprep.subr.mxu0 0.0
    %109 = vmatpush1.msra.mxu0 0.0
    %110 = vmatprep.subr.mxu0 0.0
    %111 = vmatpush1.msra.mxu0 0.0
    %112 = vmatprep.subr.mxu0 0.0
    %113 = vmatpush1.msra.mxu0 0.0
    %114 = vmatprep.subr.mxu0 0.0
    %115 = vmatpush1.msra.mxu0 0.0
    %116 = vmatprep.subr.mxu0 0.0
    %117 = vmatpush1.msra.mxu0 0.0
    %118 = vmatprep.subr.mxu0 0.0
    %119 = vmatpush1.msra.mxu0 0.0
    %120 = vmatprep.subr.mxu0 0.0
    %121 = vmatpush1.msra.mxu0 0.0
    %122 = vmatprep.subr.mxu0 0.0
    %123 = vmatpush1.msra.mxu0 0.0
    %124 = vmatprep.subr.mxu0 0.0
    %125 = vmatpush1.msra.mxu0 0.0
    %126 = vmatprep.subr.mxu0 0.0
    %127 = vmatpush1.msra.mxu0 0.0
    %128 = vmatprep.subr.mxu0 0.0
    %129 = vmatpush1.msra.mxu0 0.0
    %130 = vmatprep.subr.mxu0 0.0
    %131 = vmatpush1.msra.mxu0 0.0
    %132 = vmatprep.subr.mxu0 0.0
    %133 = vmatpush1.msra.mxu0 0.0
    %134 = vmatprep.subr.mxu0 0.0
    %135 = vmatpush1.msra.mxu0 0.0
    %136 = vmatprep.mubr.f32.mxu0 0.0
    %137 = vmatmul.mubr.f32.gmra.mrb[0].mxu0 %v67
    %v138 = vpop.f32.mrb[0].mxu0
    %v139 = vadd.f32 %v63, %v138
    %v140 = vpop.f32.mrb[0].mxu0
    %141 = vmatprep.mubr.f32.mxu0 0.0
    %142 = vmatmul.mubr.f32.gmra.mrb[0].mxu0 %v70
    %v143 = vpop.f32.mrb[0].mxu0
    %v144 = vadd.f32 %v63, %v143
    %v145 = vpop.f32.mrb[0].mxu0
    %146 = vdwg.mxu0
    %v147 = vld [vmem:[#allocation3] sm:$0xff]
    %v148 = vld [vmem:[#allocation3 + $0x8] sm:$0xff]
    %149 = vmax.xlane.f32.xlu0 %v139
    %v150 = vpop.xlane.xlu0 %149
    %151 = vmax.xlane.f32.xlu0 %v144
    %v152 = vpop.xlane.xlu0 %151
    %v153 = vmax.f32 %v147, %v150
    %v154 = vmax.f32 %v148, %v152
    %v155 = vsub.f32 %v147, %v153
    %v156 = vsub.f32 %v148, %v154
    %v157 = vmul.f32 %v155, 1.442695
    %v158 = vpow.pop %v157
    %v159 = vmul.f32 %v156, 1.442695
    %v160 = vpow.pop %v159
    %v161 = vld [vmem:[#allocation4] sm:$0xff]
    %v162 = vld [vmem:[#allocation4 + $0x8] sm:$0xff]
    %v163 = vmul.f32 %v158, %v161
    %v164 = vmul.f32 %v160, %v162
    %166 = vset.pattern.permute.xlu0 0
    %167 = vperm.xlu0 %166, %v153
    %v168 = vpop.permute.xlu0 %167
    %171 = vset.pattern.permute.xlu0 0
    %172 = vperm.xlu0 %171, %v154
    %v173 = vpop.permute.xlu0 %172
    %v175 = vsub.f32 %v139, %v168
    %v176 = vsub.f32 %v144, %v173
    %v177 = vmul.f32 %v175, 1.442695
    %v178 = vpow.pop %v177
    %v179 = vmul.f32 %v176, 1.442695
    %v180 = vpow.pop %v179
    %181 = vadd.xlane.f32.xlu0 %v178
    %v182 = vpop.xlane.xlu0 %181
    %183 = vadd.xlane.f32.xlu0 %v180
    %v184 = vpop.xlane.xlu0 %183
    %v185 = vadd.f32 %v163, %v182
    %v186 = vadd.f32 %v164, %v184
    %vm187 = vcmask 7168
    %188 = vst.msk [vmem:[#allocation4] sm:$0xff] %vm187, %v185
    %189 = vst.msk [vmem:[#allocation4 + $0x8] sm:$0xff] %vm187, %v186
    %190 = vst.msk [vmem:[#allocation3] sm:$0xff] %vm187, %v153
    %191 = vst.msk [vmem:[#allocation3 + $0x8] sm:$0xff] %vm187, %v154
    %s192 = smul.u32 0, 16
    %s193 = scalar_lea.vmem [#allocation2], %s192
    %194 = vst [vmem:[%s193] sm:$0xff] %v139
    %195 = vst [vmem:[%s193 + $0x8] sm:$0xff] %v144
    // Predicated region
    $region26: #{tpu_custom_call.1} parent=1 // pred_check
      %p196 = pneg %p43
    $region27: #{tpu_custom_call.1} parent=1 // pred_check_branch
      %198 = sbr.rel (%p196) target = $region29
    $region28: #{tpu_custom_call.1} parent=1 // pred_region
      %v199 = vld [vmem:[#allocation3] sm:$0xff]
      %v200 = vld [vmem:[#allocation3 + $0x8] sm:$0xff]
      %v201 = vld [vmem:[#allocation4] sm:$0xff]
      %v202 = vld [vmem:[#allocation4 + $0x8] sm:$0xff]
      %v203 = vlog2.pop %v201
      %v204 = vmul.f32 %v203, 0.6931472
      %v205 = vlog2.pop %v202
      %v206 = vmul.f32 %v205, 0.6931472
      %v207 = vadd.f32 %v199, %v204
      %v208 = vadd.f32 %v200, %v206
      %v209 = vld [vmem:[#allocation2] sm:$0xff]
      %v210 = vld [vmem:[#allocation2 + $0x8] sm:$0xff]
      %212 = vset.pattern.permute.xlu0 0
      %213 = vperm.xlu0 %212, %v207
      %v214 = vpop.permute.xlu0 %213
      %217 = vset.pattern.permute.xlu0 0
      %218 = vperm.xlu0 %217, %v208
      %v219 = vpop.permute.xlu0 %218
      %v221 = vsub.f32 %v209, %v214
      %v222 = vsub.f32 %v210, %v219
      %223 = vst [vmem:[#allocation10] sm:$0xff] %v221
      %224 = vst [vmem:[#allocation10 + $0x8] sm:$0xff] %v222
    $region29: #{tpu_custom_call.1} parent=1 // pred_fallthru
      _
    // Predicated region
    $region30: #{tpu_custom_call.1} parent=1 // pred_check
      _
    $region31: #{tpu_custom_call.1} parent=1 // pred_check_branch
      %226 = sbr.rel (0) target = $region33
    $region32: #{tpu_custom_call.1} parent=1 // pred_region
      %s228 = ssub.s32 256, 256
      %229 = vsyncadd [#allocation7], %s228
      %s230 = sshll.u32 [#allocation10], 4
      %s231 = int_to_ptr.vmem [resolvable:$true] %s230
      %236 = dma.vmem_to_hbm [thread:$0]  %s231, 256, %s3, [#allocation7], 128, 128, 8
    $region33: #{tpu_custom_call.1} parent=1 // pred_fallthru
      _
    // Predicated region
    $region34: #{tpu_custom_call.1} parent=1 // pred_check
      _
    $region35: #{tpu_custom_call.1} parent=1 // pred_check_branch
      %238 = sbr.rel (0) target = $region37
    $region36: #{tpu_custom_call.1} parent=1 // pred_region
      %239 = dma.done [#allocation7], 256
    $region37: #{tpu_custom_call.1} parent=1 // pred_fallthru
      _
    %240 = vsyncpa [#allocation6], 1
    %241 = vsyncpa [#allocation9], 1
    %242 = vsyncpa [#allocation7], 1

</llo_original>
